<compile_context>
chip_gen: v6e
topology: v6e:2x2x1
jax: 0.10.0
libtpu: 0.0.40
codegen_flags: <defaults>
</compile_context>

<pallas_src>
import functools

import jax
import jax.numpy as jnp
from jax.experimental import pallas as pl
from jax.experimental.pallas import tpu as pltpu


def _round_up(n, m):
    return ((n + m - 1) // m) * m


def _leaky_relu(x, slope=0.01):
    return jnp.where(x > 0, x, slope * x)


def _block_diag(w, g):
    """(k, n) -> (g*k, g*n) block-diagonal with `w` repeated on the diagonal."""
    k, n = w.shape
    eye = jnp.eye(g, dtype=w.dtype)
    return (eye[:, None, :, None] * w[None, :, None, :]).reshape(g * k, g * n)


def _mlp_kernel(x_ref,
                w1_ref, b1_ref,
                w2_ref, b2_ref,
                w3_ref, b3_ref,
                w4_ref, b4_ref,
                o_ref, *, compute_dtype):
    cd = compute_dtype
    # Layers 1-3: Linear + LeakyReLU(0.01).  Matmul operands are `cd` (bf16 by
    # default, pre-cast in the wrapper) with f32 MXU accumulation; bias add and
    # LeakyReLU stay in f32.
    h = jnp.dot(x_ref[...], w1_ref[...], preferred_element_type=jnp.float32)
    h = _leaky_relu(h + b1_ref[...])

    h = jnp.dot(h.astype(cd), w2_ref[...], preferred_element_type=jnp.float32)
    h = _leaky_relu(h + b2_ref[...])

    h = jnp.dot(h.astype(cd), w3_ref[...], preferred_element_type=jnp.float32)
    h = _leaky_relu(h + b3_ref[...])

    # Layer 4: plain matmul against the block-diagonal (G*l3, G) weight.  The
    # (bt/G, G) row-major result is exactly the per-row outputs in order.
    out = jnp.dot(h.astype(cd), w4_ref[...], preferred_element_type=jnp.float32)
    o_ref[...] = (out + b4_ref[...]).astype(o_ref.dtype)


def lsm_continuation_nn(x, params, *, batch_tile=2048, pack_rows=4,
                        compute_dtype=jnp.bfloat16):
    """Forward pass of LSMContinuationNN.

    x: (batch, dimensions) float32 or bfloat16
    params: dict with w1..w4 stored (in, out) and b1..b4 stored (1, out)
    returns: (batch, 1) float32

    compute_dtype=jnp.bfloat16 (default) runs matmul operands in bf16 with f32
    accumulation (~1e-3 relative error vs f32, ~3-5x faster).  Pass
    compute_dtype=jnp.float32 for results bit-identical to the f32 reference.
    """
    B, D = x.shape
    G = int(pack_rows)
    assert G >= 1 and 128 % G == 0, "pack_rows must divide 128"
    cd = compute_dtype

    w1, b1 = params["w1"], params["b1"]
    w2, b2 = params["w2"], params["b2"]
    w3, b3 = params["w3"], params["b3"]
    w4, b4 = params["w4"], params["b4"]
    l1, l2, l3 = w1.shape[1], w2.shape[1], w3.shape[1]

    # Block-diagonal weights: G batch rows are packed into one matmul row, so
    # hidden activations are G*l lanes wide (128 for l=32, G=4).  Matmul
    # operands are pre-cast to the compute dtype once here; biases stay f32.
    w1b = _block_diag(w1.astype(cd), G)                 # (G*D,  G*l1)
    w2b = _block_diag(w2.astype(cd), G)                 # (G*l1, G*l2)
    w3b = _block_diag(w3.astype(cd), G)                 # (G*l2, G*l3)
    w4b = _block_diag(w4.reshape(l3, 1).astype(cd), G)  # (G*l3, G)
    b1b = jnp.tile(b1.reshape(1, l1).astype(jnp.float32), (1, G))
    b2b = jnp.tile(b2.reshape(1, l2).astype(jnp.float32), (1, G))
    b3b = jnp.tile(b3.reshape(1, l3).astype(jnp.float32), (1, G))
    b4b = jnp.tile(b4.reshape(1, 1).astype(jnp.float32), (1, G))

    # Batch tile: 128-aligned, capped so (a) small batches are not padded up
    # to a huge tile and (b) the grid has >=2 steps whenever B > 128, letting
    # ("parallel",) shard across v7x's two TensorCores.
    bt = int(min(int(batch_tile),
                 _round_up(pl.cdiv(B, 2), 128),
                 _round_up(B, 128)))
    bt = _round_up(max(bt, 128), 128)
    b_pad = _round_up(B, bt)
    if b_pad != B:
        x = jnp.pad(x, ((0, b_pad - B), (0, 0)))

    # Pack G rows per matmul row (pure row-major reshape) and cast the dominant
    # x HBM stream to the compute dtype once, outside the kernel.
    x_pk = x.reshape(b_pad // G, G * D).astype(cd)
    grid = (b_pad // bt,)
    rt = bt // G  # packed rows per tile

    # Weights/biases are tiny -> whole-array blocks with constant index maps
    # (no re-DMA between grid steps).
    def _const(shape):
        return pl.BlockSpec(shape, lambda i: (0, 0))

    out = pl.pallas_call(
        functools.partial(_mlp_kernel, compute_dtype=cd),
        out_shape=jax.ShapeDtypeStruct((b_pad // G, G), jnp.float32),
        grid_spec=pltpu.PrefetchScalarGridSpec(
            num_scalar_prefetch=0,
            grid=grid,
            in_specs=[
                pl.BlockSpec((rt, G * D), lambda i: (i, 0)),   # packed x tile
                _const((G * D, G * l1)), _const((1, G * l1)),
                _const((G * l1, G * l2)), _const((1, G * l2)),
                _const((G * l2, G * l3)), _const((1, G * l3)),
                _const((G * l3, G)), _const((1, G)),
            ],
            out_specs=pl.BlockSpec((rt, G), lambda i: (i, 0)),
        ),
        compiler_params=pltpu.CompilerParams(
            dimension_semantics=("parallel",)),
    )(x_pk, w1b, b1b, w2b, b2b, w3b, b3b, w4b, b4b)

    # (b_pad//G, G) row-major == the b_pad outputs in order; drop pad rows.
    # Callers that can consume the packed (B//G, G) slab directly may skip
    # this tiny (4 bytes/row) relayout.
    return out.reshape(b_pad, 1)[:B]


def init_params(key, dimensions, nn_layers):
    """Deterministic synthetic init matching nn.Linear shapes (stored (in,out))."""
    l1, l2, l3 = nn_layers
    sizes = [(dimensions, l1), (l1, l2), (l2, l3), (l3, 1)]
    params = {}
    for idx, (fan_in, fan_out) in enumerate(sizes, start=1):
        key, kw, kb = jax.random.split(key, 3)
        bound = 1.0 / jnp.sqrt(fan_in)
        params[f"w{idx}"] = jax.random.uniform(
            kw, (fan_in, fan_out), jnp.float32, -bound, bound)
        params[f"b{idx}"] = jax.random.uniform(
            kb, (1, fan_out), jnp.float32, -bound, bound)
    return params


def _reference(x, params):
    h = x.astype(jnp.float32)
    for idx in range(1, 4):
        h = h @ params[f"w{idx}"] + params[f"b{idx}"].reshape(1, -1)
        h = jnp.where(h > 0, h, 0.01 * h)
    return h @ params["w4"] + params["b4"].reshape(1, 1)


if __name__ == "__main__":
    dimensions = 8
    nn_layers = [32, 32, 32]

    key = jax.random.PRNGKey(0)
    key, kx = jax.random.split(key)
    params = init_params(key, dimensions, nn_layers)

    # Case 1: small, non-128-multiple batch (padding path), f32 compute ->
    # must match the f32 reference tightly.
    batch = 200
    x = jax.random.normal(kx, (batch, dimensions), jnp.float32)
    fwd_f32 = jax.jit(functools.partial(lsm_continuation_nn,
                                        compute_dtype=jnp.float32))
    out = jax.block_until_ready(fwd_f32(x, params))
    ref = _reference(x, params)
    assert out.shape == (batch, 1), out.shape
    assert jnp.allclose(out, ref, atol=1e-5, rtol=1e-5), (
        float(jnp.max(jnp.abs(out - ref))))

    # Case 2: multi-step grid (batch_tile=256 -> grid=(4,)), f32 compute.
    batch2 = 1024
    key, kx2 = jax.random.split(key)
    x2 = jax.random.normal(kx2, (batch2, dimensions), jnp.float32)
    fwd2 = jax.jit(functools.partial(lsm_continuation_nn, batch_tile=256,
                                     compute_dtype=jnp.float32))
    out2 = jax.block_until_ready(fwd2(x2, params))
    ref2 = _reference(x2, params)
    assert out2.shape == (batch2, 1), out2.shape
    assert jnp.allclose(out2, ref2, atol=1e-5, rtol=1e-5), (
        float(jnp.max(jnp.abs(out2 - ref2))))

    # Case 3: default fast path (bf16 MXU operands, f32 accumulation); the
    # v7x grid cap gives grid=(2,) here.  Loose tolerance vs the f32 reference.
    fwd_fast = jax.jit(lsm_continuation_nn)
    out_bf = jax.block_until_ready(fwd_fast(x2, params))
    assert out_bf.shape == (batch2, 1), out_bf.shape
    assert bool(jnp.all(jnp.isfinite(out_bf)))
    assert float(jnp.max(jnp.abs(out_bf - ref2))) < 0.2, (
        float(jnp.max(jnp.abs(out_bf - ref2))))

    print("KERNEL_OK")
</pallas_src>

<mosaic_0001>
module attributes {stable_mosaic.version = 11 : i64} {
  func.func @_mlp_kernel(%arg0: i32, %arg1: memref<32x32xf32, #tpu.memory_space<vmem>>, %arg2: memref<32x128xf32, #tpu.memory_space<vmem>>, %arg3: memref<1x128xf32, #tpu.memory_space<vmem>>, %arg4: memref<128x128xf32, #tpu.memory_space<vmem>>, %arg5: memref<1x128xf32, #tpu.memory_space<vmem>>, %arg6: memref<128x128xf32, #tpu.memory_space<vmem>>, %arg7: memref<1x128xf32, #tpu.memory_space<vmem>>, %arg8: memref<128x4xf32, #tpu.memory_space<vmem>>, %arg9: memref<1x4xf32, #tpu.memory_space<vmem>>, %arg10: memref<32x4xf32, #tpu.memory_space<vmem>>) attributes {dimension_semantics = [#tpu.dimension_semantics<parallel>], iteration_bounds = array<i64: 2>, scalar_prefetch = 0 : i64, scratch_operands = 0 : i64, tpu.core_type = #tpu.core_type<tc>, window_params = [{transform_indices = @transform_0, window_bounds = array<i64: 32, 32>}, {pipeline_mode = #tpu.pipeline_mode<synchronous>, transform_indices = @transform_1, window_bounds = array<i64: 32, 128>}, {pipeline_mode = #tpu.pipeline_mode<synchronous>, transform_indices = @transform_2, window_bounds = array<i64: 1, 128>}, {pipeline_mode = #tpu.pipeline_mode<synchronous>, transform_indices = @transform_3, window_bounds = array<i64: 128, 128>}, {pipeline_mode = #tpu.pipeline_mode<synchronous>, transform_indices = @transform_4, window_bounds = array<i64: 1, 128>}, {pipeline_mode = #tpu.pipeline_mode<synchronous>, transform_indices = @transform_5, window_bounds = array<i64: 128, 128>}, {pipeline_mode = #tpu.pipeline_mode<synchronous>, transform_indices = @transform_6, window_bounds = array<i64: 1, 128>}, {pipeline_mode = #tpu.pipeline_mode<synchronous>, transform_indices = @transform_7, window_bounds = array<i64: 128, 4>}, {pipeline_mode = #tpu.pipeline_mode<synchronous>, transform_indices = @transform_8, window_bounds = array<i64: 1, 4>}, {transform_indices = @transform_9, window_bounds = array<i64: 32, 4>}]} {
    %c0 = arith.constant 0 : index
    %c0_0 = arith.constant 0 : index
    %0 = vector.load %arg1[%c0, %c0_0] : memref<32x32xf32, #tpu.memory_space<vmem>>, vector<32x32xf32>
    %c0_1 = arith.constant 0 : index
    %c0_2 = arith.constant 0 : index
    %1 = vector.load %arg2[%c0_1, %c0_2] : memref<32x128xf32, #tpu.memory_space<vmem>>, vector<32x128xf32>
    %cst = arith.constant dense<0.000000e+00> : vector<32x128xf32>
    %2 = tpu.matmul %0, %1, %cst {dimension_numbers = #tpu.dot_dimension_numbers<[1], [0], [0], [1], [0, 0, 1, 1], [], []>} : vector<32x32xf32>, vector<32x128xf32>, vector<32x128xf32> -> vector<32x128xf32>
    %c0_3 = arith.constant 0 : index
    %c0_4 = arith.constant 0 : index
    %3 = vector.load %arg3[%c0_3, %c0_4] : memref<1x128xf32, #tpu.memory_space<vmem>>, vector<1x128xf32>
    %4 = vector.broadcast %3 : vector<1x128xf32> to vector<32x128xf32>
    %5 = arith.addf %2, %4 : vector<32x128xf32>
    %cst_5 = arith.constant 0.000000e+00 : f32
    %6 = vector.broadcast %cst_5 : f32 to vector<32x128xf32>
    %7 = arith.cmpf ogt, %5, %6 : vector<32x128xf32>
    %cst_6 = arith.constant 0.00999999977 : f32
    %8 = vector.broadcast %cst_6 : f32 to vector<32x128xf32>
    %9 = arith.mulf %8, %5 : vector<32x128xf32>
    %10 = arith.select %7, %5, %9 : vector<32x128xi1>, vector<32x128xf32>
    %c0_7 = arith.constant 0 : index
    %c0_8 = arith.constant 0 : index
    %11 = vector.load %arg4[%c0_7, %c0_8] : memref<128x128xf32, #tpu.memory_space<vmem>>, vector<128x128xf32>
    %cst_9 = arith.constant dense<0.000000e+00> : vector<32x128xf32>
    %12 = tpu.matmul %10, %11, %cst_9 {dimension_numbers = #tpu.dot_dimension_numbers<[1], [0], [0], [1], [0, 0, 1, 1], [], []>} : vector<32x128xf32>, vector<128x128xf32>, vector<32x128xf32> -> vector<32x128xf32>
    %c0_10 = arith.constant 0 : index
    %c0_11 = arith.constant 0 : index
    %13 = vector.load %arg5[%c0_10, %c0_11] : memref<1x128xf32, #tpu.memory_space<vmem>>, vector<1x128xf32>
    %14 = vector.broadcast %13 : vector<1x128xf32> to vector<32x128xf32>
    %15 = arith.addf %12, %14 : vector<32x128xf32>
    %cst_12 = arith.constant 0.000000e+00 : f32
    %16 = vector.broadcast %cst_12 : f32 to vector<32x128xf32>
    %17 = arith.cmpf ogt, %15, %16 : vector<32x128xf32>
    %cst_13 = arith.constant 0.00999999977 : f32
    %18 = vector.broadcast %cst_13 : f32 to vector<32x128xf32>
    %19 = arith.mulf %18, %15 : vector<32x128xf32>
    %20 = arith.select %17, %15, %19 : vector<32x128xi1>, vector<32x128xf32>
    %c0_14 = arith.constant 0 : index
    %c0_15 = arith.constant 0 : index
    %21 = vector.load %arg6[%c0_14, %c0_15] : memref<128x128xf32, #tpu.memory_space<vmem>>, vector<128x128xf32>
    %cst_16 = arith.constant dense<0.000000e+00> : vector<32x128xf32>
    %22 = tpu.matmul %20, %21, %cst_16 {dimension_numbers = #tpu.dot_dimension_numbers<[1], [0], [0], [1], [0, 0, 1, 1], [], []>} : vector<32x128xf32>, vector<128x128xf32>, vector<32x128xf32> -> vector<32x128xf32>
    %c0_17 = arith.constant 0 : index
    %c0_18 = arith.constant 0 : index
    %23 = vector.load %arg7[%c0_17, %c0_18] : memref<1x128xf32, #tpu.memory_space<vmem>>, vector<1x128xf32>
    %24 = vector.broadcast %23 : vector<1x128xf32> to vector<32x128xf32>
    %25 = arith.addf %22, %24 : vector<32x128xf32>
    %cst_19 = arith.constant 0.000000e+00 : f32
    %26 = vector.broadcast %cst_19 : f32 to vector<32x128xf32>
    %27 = arith.cmpf ogt, %25, %26 : vector<32x128xf32>
    %cst_20 = arith.constant 0.00999999977 : f32
    %28 = vector.broadcast %cst_20 : f32 to vector<32x128xf32>
    %29 = arith.mulf %28, %25 : vector<32x128xf32>
    %30 = arith.select %27, %25, %29 : vector<32x128xi1>, vector<32x128xf32>
    %c0_21 = arith.constant 0 : index
    %c0_22 = arith.constant 0 : index
    %31 = vector.load %arg8[%c0_21, %c0_22] : memref<128x4xf32, #tpu.memory_space<vmem>>, vector<128x4xf32>
    %cst_23 = arith.constant dense<0.000000e+00> : vector<32x4xf32>
    %32 = tpu.matmul %30, %31, %cst_23 {dimension_numbers = #tpu.dot_dimension_numbers<[1], [0], [0], [1], [0, 0, 1, 1], [], []>} : vector<32x128xf32>, vector<128x4xf32>, vector<32x4xf32> -> vector<32x4xf32>
    %c0_24 = arith.constant 0 : index
    %c0_25 = arith.constant 0 : index
    %33 = vector.load %arg9[%c0_24, %c0_25] : memref<1x4xf32, #tpu.memory_space<vmem>>, vector<1x4xf32>
    %34 = vector.broadcast %33 : vector<1x4xf32> to vector<32x4xf32>
    %35 = arith.addf %32, %34 : vector<32x4xf32>
    %c0_26 = arith.constant 0 : index
    %c0_27 = arith.constant 0 : index
    %36 = vector.load %arg10[%c0_26, %c0_27] : memref<32x4xf32, #tpu.memory_space<vmem>>, vector<32x4xf32>
    tpu.vector_store %arg10[%c0_26, %c0_27], %35 {strides = array<i32>} : memref<32x4xf32, #tpu.memory_space<vmem>>, vector<32x4xf32>,
    return
  }
  func.func @transform_0(%arg0: i32) -> (i32, i32) {
    %c0_i32 = arith.constant 0 : i32
    %c0_i32_0 = arith.constant 0 : i32
    return %arg0, %c0_i32 : i32, i32
  }
  func.func @transform_1(%arg0: i32) -> (i32, i32) {
    %c0_i32 = arith.constant 0 : i32
    %c0_i32_0 = arith.constant 0 : i32
    %c0_i32_1 = arith.constant 0 : i32
    return %c0_i32, %c0_i32_0 : i32, i32
  }
  func.func @transform_2(%arg0: i32) -> (i32, i32) {
    %c0_i32 = arith.constant 0 : i32
    %c0_i32_0 = arith.constant 0 : i32
    %c0_i32_1 = arith.constant 0 : i32
    return %c0_i32, %c0_i32_0 : i32, i32
  }
  func.func @transform_3(%arg0: i32) -> (i32, i32) {
    %c0_i32 = arith.constant 0 : i32
    %c0_i32_0 = arith.constant 0 : i32
    %c0_i32_1 = arith.constant 0 : i32
    return %c0_i32, %c0_i32_0 : i32, i32
  }
  func.func @transform_4(%arg0: i32) -> (i32, i32) {
    %c0_i32 = arith.constant 0 : i32
    %c0_i32_0 = arith.constant 0 : i32
    %c0_i32_1 = arith.constant 0 : i32
    return %c0_i32, %c0_i32_0 : i32, i32
  }
  func.func @transform_5(%arg0: i32) -> (i32, i32) {
    %c0_i32 = arith.constant 0 : i32
    %c0_i32_0 = arith.constant 0 : i32
    %c0_i32_1 = arith.constant 0 : i32
    return %c0_i32, %c0_i32_0 : i32, i32
  }
  func.func @transform_6(%arg0: i32) -> (i32, i32) {
    %c0_i32 = arith.constant 0 : i32
    %c0_i32_0 = arith.constant 0 : i32
    %c0_i32_1 = arith.constant 0 : i32
    return %c0_i32, %c0_i32_0 : i32, i32
  }
  func.func @transform_7(%arg0: i32) -> (i32, i32) {
    %c0_i32 = arith.constant 0 : i32
    %c0_i32_0 = arith.constant 0 : i32
    %c0_i32_1 = arith.constant 0 : i32
    return %c0_i32, %c0_i32_0 : i32, i32
  }
  func.func @transform_8(%arg0: i32) -> (i32, i32) {
    %c0_i32 = arith.constant 0 : i32
    %c0_i32_0 = arith.constant 0 : i32
    %c0_i32_1 = arith.constant 0 : i32
    return %c0_i32, %c0_i32_0 : i32, i32
  }
  func.func @transform_9(%arg0: i32) -> (i32, i32) {
    %c0_i32 = arith.constant 0 : i32
    %c0_i32_0 = arith.constant 0 : i32
    return %arg0, %c0_i32 : i32, i32
  }
}

</mosaic_0001>

<llo_original>
// kernel: lsm_continuation_nn.1
$region0: #{lsm_continuation_nn.1}
  #allocation0 [shape = 'u32[]', space=smem, size = 0x4, offset = 0x4, fixed_abs, tag = 'smem constant byte address 0x4 - core index']
  #allocation1 [shape = 'u32[144,128]{1,0:T(1,128)}', space=vmem, size = 0x12000, scoped, tag = 'internal scratch']
  %s0 = inlined_call_operand.vmem [shape: f32[64,32], index: 0, kind: input, shape index: {}]
  %s1 = inlined_call_operand.vmem [shape: f32[32,128], index: 1, kind: input, shape index: {}]
  %s2 = inlined_call_operand.vmem [shape: f32[1,128], index: 2, kind: input, shape index: {}]
  %s3 = inlined_call_operand.vmem [shape: f32[128,128], index: 3, kind: input, shape index: {}]
  %s4 = inlined_call_operand.vmem [shape: f32[1,128], index: 4, kind: input, shape index: {}]
  %s5 = inlined_call_operand.vmem [shape: f32[128,128], index: 5, kind: input, shape index: {}]
  %s6 = inlined_call_operand.vmem [shape: f32[1,128], index: 6, kind: input, shape index: {}]
  %s7 = inlined_call_operand.vmem [shape: f32[128,4], index: 7, kind: input, shape index: {}]
  %s8 = inlined_call_operand.vmem [shape: f32[1,4], index: 8, kind: input, shape index: {}]
  %s9 = inlined_call_operand.vmem [shape: f32[64,4], index: 9, kind: output, shape index: {}]
  %s10 = sld [smem:[#allocation0]]
  $region69: #{lsm_continuation_nn.1} parent=0
    _
  %s12 = ssub.s32 1, %s10
  %s13 = scalar_select 0, %s12, %s10
  loop: start=0, step=1, limit=4
  $region2: #{lsm_continuation_nn.1} parent=0 // loop_pre_header
    _
  $region3: #{lsm_continuation_nn.1} parent=0 // loop_header
    %s15 = sphi 0, %s19
    %p16 = scmp.ge.s32.totalorder %s15, 4
    %s25 = sphi 0, %s27
    %s28 = sphi 0, %s25
    %s29 = sphi 0, %s28
    %s45 = sphi 0, %s29
    %s49 = sphi 0, %s49
    %s51 = sphi 0, %s49
    %s52 = sphi 0, %s51
    %s66 = sphi 0, %s52
    %s70 = sphi 0, %s70
    %s72 = sphi 0, %s70
    %s73 = sphi 0, %s72
    %s87 = sphi 0, %s73
    %s91 = sphi 0, %s91
    %s93 = sphi 0, %s91
    %s94 = sphi 0, %s93
    %s108 = sphi 0, %s94
    %s112 = sphi 0, %s112
    %s114 = sphi 0, %s112
    %s115 = sphi 0, %s114
    %s129 = sphi 0, %s115
    %s133 = sphi 0, %s133
    %s135 = sphi 0, %s133
    %s136 = sphi 0, %s135
    %s150 = sphi 0, %s136
    %s154 = sphi 0, %s154
    %s156 = sphi 0, %s154
    %s157 = sphi 0, %s156
    %s171 = sphi 0, %s157
    %s175 = sphi 0, %s175
    %s177 = sphi 0, %s175
    %s178 = sphi 0, %s177
    %s192 = sphi 0, %s178
    %s196 = sphi 0, %s196
    %s198 = sphi 0, %s196
    %s199 = sphi 0, %s198
    %s213 = sphi 0, %s199
    %s219 = sphi 0, %s221
    %s222 = sphi 0, %s219
    %s223 = sphi 0, %s222
    %s239 = sphi 0, %s223
  $region4: #{lsm_continuation_nn.1} parent=0 // loop_header_branch
    %18 = sbr.rel (%p16) target = $region8
  $region5: #{lsm_continuation_nn.1} parent=0 // loop_body
    %s20 = ssub.s32 %s15, 1
    %s21 = ssub.s32 %s15, 2
    %s22 = sadd.s32 %s15, 1
    %s23 = ssub.s32 %s15, %s22
    %p24 = scmp.eq.s32.totalorder %s23, 0
    %s26 = sadd.s32 %s25, 1
    %s27 = scalar_select %p24, %s25, %s26
    %p30 = pneg %p24
    %p31 = scmp.eq.s32.totalorder %s15, 1
    %p32 = por %p30, %p31
    %p33 = scmp.ne.s32.totalorder %s25, %s28
    %p34 = scmp.eq.s32.totalorder %s15, 0
    %p35 = por %p33, %p34
    %p36 = scmp.ne.s32.totalorder %s25, %s28
    %p37 = scmp.eq.s32.totalorder %s20, 1
    %p38 = por %p36, %p37
    %p39 = scmp.ne.s32.totalorder %s28, %s29
    %p40 = scmp.eq.s32.totalorder %s20, 0
    %p41 = por %p39, %p40
    %p42 = scmp.ne.s32.totalorder %s28, %s29
    %p43 = scmp.eq.s32.totalorder %s21, 1
    %p44 = por %p42, %p43
    %p46 = scmp.ne.s32.totalorder %s29, %s45
    %p47 = scmp.eq.s32.totalorder %s21, 0
    %p48 = por %p46, %p47
    %s50 = sadd.s32 %s49, 1
    %p53 = scmp.eq.s32.totalorder %s15, 1
    %p54 = scmp.ne.s32.totalorder %s49, %s51
    %p55 = scmp.eq.s32.totalorder %s15, 0
    %p56 = por %p54, %p55
    %p57 = scmp.ne.s32.totalorder %s49, %s51
    %p58 = scmp.eq.s32.totalorder %s20, 1
    %p59 = por %p57, %p58
    %p60 = scmp.ne.s32.totalorder %s51, %s52
    %p61 = scmp.eq.s32.totalorder %s20, 0
    %p62 = por %p60, %p61
    %p63 = scmp.ne.s32.totalorder %s51, %s52
    %p64 = scmp.eq.s32.totalorder %s21, 1
    %p65 = por %p63, %p64
    %p67 = scmp.ne.s32.totalorder %s52, %s66
    %p68 = scmp.eq.s32.totalorder %s21, 0
    %p69 = por %p67, %p68
    %s71 = sadd.s32 %s70, 1
    %p74 = scmp.eq.s32.totalorder %s15, 1
    %p75 = scmp.ne.s32.totalorder %s70, %s72
    %p76 = scmp.eq.s32.totalorder %s15, 0
    %p77 = por %p75, %p76
    %p78 = scmp.ne.s32.totalorder %s70, %s72
    %p79 = scmp.eq.s32.totalorder %s20, 1
    %p80 = por %p78, %p79
    %p81 = scmp.ne.s32.totalorder %s72, %s73
    %p82 = scmp.eq.s32.totalorder %s20, 0
    %p83 = por %p81, %p82
    %p84 = scmp.ne.s32.totalorder %s72, %s73
    %p85 = scmp.eq.s32.totalorder %s21, 1
    %p86 = por %p84, %p85
    %p88 = scmp.ne.s32.totalorder %s73, %s87
    %p89 = scmp.eq.s32.totalorder %s21, 0
    %p90 = por %p88, %p89
    %s92 = sadd.s32 %s91, 1
    %p95 = scmp.eq.s32.totalorder %s15, 1
    %p96 = scmp.ne.s32.totalorder %s91, %s93
    %p97 = scmp.eq.s32.totalorder %s15, 0
    %p98 = por %p96, %p97
    %p99 = scmp.ne.s32.totalorder %s91, %s93
    %p100 = scmp.eq.s32.totalorder %s20, 1
    %p101 = por %p99, %p100
    %p102 = scmp.ne.s32.totalorder %s93, %s94
    %p103 = scmp.eq.s32.totalorder %s20, 0
    %p104 = por %p102, %p103
    %p105 = scmp.ne.s32.totalorder %s93, %s94
    %p106 = scmp.eq.s32.totalorder %s21, 1
    %p107 = por %p105, %p106
    %p109 = scmp.ne.s32.totalorder %s94, %s108
    %p110 = scmp.eq.s32.totalorder %s21, 0
    %p111 = por %p109, %p110
    %s113 = sadd.s32 %s112, 1
    %p116 = scmp.eq.s32.totalorder %s15, 1
    %p117 = scmp.ne.s32.totalorder %s112, %s114
    %p118 = scmp.eq.s32.totalorder %s15, 0
    %p119 = por %p117, %p118
    %p120 = scmp.ne.s32.totalorder %s112, %s114
    %p121 = scmp.eq.s32.totalorder %s20, 1
    %p122 = por %p120, %p121
    %p123 = scmp.ne.s32.totalorder %s114, %s115
    %p124 = scmp.eq.s32.totalorder %s20, 0
    %p125 = por %p123, %p124
    %p126 = scmp.ne.s32.totalorder %s114, %s115
    %p127 = scmp.eq.s32.totalorder %s21, 1
    %p128 = por %p126, %p127
    %p130 = scmp.ne.s32.totalorder %s115, %s129
    %p131 = scmp.eq.s32.totalorder %s21, 0
    %p132 = por %p130, %p131
    %s134 = sadd.s32 %s133, 1
    %p137 = scmp.eq.s32.totalorder %s15, 1
    %p138 = scmp.ne.s32.totalorder %s133, %s135
    %p139 = scmp.eq.s32.totalorder %s15, 0
    %p140 = por %p138, %p139
    %p141 = scmp.ne.s32.totalorder %s133, %s135
    %p142 = scmp.eq.s32.totalorder %s20, 1
    %p143 = por %p141, %p142
    %p144 = scmp.ne.s32.totalorder %s135, %s136
    %p145 = scmp.eq.s32.totalorder %s20, 0
    %p146 = por %p144, %p145
    %p147 = scmp.ne.s32.totalorder %s135, %s136
    %p148 = scmp.eq.s32.totalorder %s21, 1
    %p149 = por %p147, %p148
    %p151 = scmp.ne.s32.totalorder %s136, %s150
    %p152 = scmp.eq.s32.totalorder %s21, 0
    %p153 = por %p151, %p152
    %s155 = sadd.s32 %s154, 1
    %p158 = scmp.eq.s32.totalorder %s15, 1
    %p159 = scmp.ne.s32.totalorder %s154, %s156
    %p160 = scmp.eq.s32.totalorder %s15, 0
    %p161 = por %p159, %p160
    %p162 = scmp.ne.s32.totalorder %s154, %s156
    %p163 = scmp.eq.s32.totalorder %s20, 1
    %p164 = por %p162, %p163
    %p165 = scmp.ne.s32.totalorder %s156, %s157
    %p166 = scmp.eq.s32.totalorder %s20, 0
    %p167 = por %p165, %p166
    %p168 = scmp.ne.s32.totalorder %s156, %s157
    %p169 = scmp.eq.s32.totalorder %s21, 1
    %p170 = por %p168, %p169
    %p172 = scmp.ne.s32.totalorder %s157, %s171
    %p173 = scmp.eq.s32.totalorder %s21, 0
    %p174 = por %p172, %p173
    %s176 = sadd.s32 %s175, 1
    %p179 = scmp.eq.s32.totalorder %s15, 1
    %p180 = scmp.ne.s32.totalorder %s175, %s177
    %p181 = scmp.eq.s32.totalorder %s15, 0
    %p182 = por %p180, %p181
    %p183 = scmp.ne.s32.totalorder %s175, %s177
    %p184 = scmp.eq.s32.totalorder %s20, 1
    %p185 = por %p183, %p184
    %p186 = scmp.ne.s32.totalorder %s177, %s178
    %p187 = scmp.eq.s32.totalorder %s20, 0
    %p188 = por %p186, %p187
    %p189 = scmp.ne.s32.totalorder %s177, %s178
    %p190 = scmp.eq.s32.totalorder %s21, 1
    %p191 = por %p189, %p190
    %p193 = scmp.ne.s32.totalorder %s178, %s192
    %p194 = scmp.eq.s32.totalorder %s21, 0
    %p195 = por %p193, %p194
    %s197 = sadd.s32 %s196, 1
    %p200 = scmp.eq.s32.totalorder %s15, 1
    %p201 = scmp.ne.s32.totalorder %s196, %s198
    %p202 = scmp.eq.s32.totalorder %s15, 0
    %p203 = por %p201, %p202
    %p204 = scmp.ne.s32.totalorder %s196, %s198
    %p205 = scmp.eq.s32.totalorder %s20, 1
    %p206 = por %p204, %p205
    %p207 = scmp.ne.s32.totalorder %s198, %s199
    %p208 = scmp.eq.s32.totalorder %s20, 0
    %p209 = por %p207, %p208
    %p210 = scmp.ne.s32.totalorder %s198, %s199
    %p211 = scmp.eq.s32.totalorder %s21, 1
    %p212 = por %p210, %p211
    %p214 = scmp.ne.s32.totalorder %s199, %s213
    %p215 = scmp.eq.s32.totalorder %s21, 0
    %p216 = por %p214, %p215
    %s217 = ssub.s32 %s15, %s22
    %p218 = scmp.eq.s32.totalorder %s217, 0
    %s220 = sadd.s32 %s219, 1
    %s221 = scalar_select %p218, %s219, %s220
    %p224 = pneg %p218
    %p225 = scmp.eq.s32.totalorder %s15, 1
    %p226 = por %p224, %p225
    %p227 = scmp.ne.s32.totalorder %s219, %s222
    %p228 = scmp.eq.s32.totalorder %s15, 0
    %p229 = por %p227, %p228
    %p230 = scmp.ne.s32.totalorder %s219, %s222
    %p231 = scmp.eq.s32.totalorder %s20, 1
    %p232 = por %p230, %p231
    %p233 = scmp.ne.s32.totalorder %s222, %s223
    %p234 = scmp.eq.s32.totalorder %s20, 0
    %p235 = por %p233, %p234
    %p236 = scmp.ne.s32.totalorder %s222, %s223
    %p237 = scmp.eq.s32.totalorder %s21, 1
    %p238 = por %p236, %p237
    %p240 = scmp.ne.s32.totalorder %s223, %s239
    %p241 = scmp.eq.s32.totalorder %s21, 0
    %p242 = por %p240, %p241
    %p243 = scmp.le.s32.totalorder 1, %s15
    %p244 = scmp.lt.s32.totalorder %s15, 3
    %p245 = pnand %p243, %p244
    %p246 = pneg %p245
    // Predicated region
    $region9: #{lsm_continuation_nn.1} parent=5 // pred_check
      _
    $region10: #{lsm_continuation_nn.1} parent=5 // pred_check_branch
      %248 = sbr.rel (%p245) target = $region12
    $region11: #{lsm_continuation_nn.1} parent=5 // pred_region
      %s249 = ssub.s32 %s15, 1
      // Predicated region
      $region13: #{lsm_continuation_nn.1} parent=11 // pred_check
        %p250 = pneg %p62
      $region14: #{lsm_continuation_nn.1} parent=11 // pred_check_branch
        %252 = sbr.rel (%p250) target = $region16
      $region15: #{lsm_continuation_nn.1} parent=11 // pred_region
        _
      $region16: #{lsm_continuation_nn.1} parent=11 // pred_fallthru
        _
      // Predicated region
      $region17: #{lsm_continuation_nn.1} parent=11 // pred_check
        %p253 = pneg %p83
      $region18: #{lsm_continuation_nn.1} parent=11 // pred_check_branch
        %255 = sbr.rel (%p253) target = $region20
      $region19: #{lsm_continuation_nn.1} parent=11 // pred_region
        _
      $region20: #{lsm_continuation_nn.1} parent=11 // pred_fallthru
        _
      // Predicated region
      $region21: #{lsm_continuation_nn.1} parent=11 // pred_check
        %p256 = pneg %p104
      $region22: #{lsm_continuation_nn.1} parent=11 // pred_check_branch
        %258 = sbr.rel (%p256) target = $region24
      $region23: #{lsm_continuation_nn.1} parent=11 // pred_region
        _
      $region24: #{lsm_continuation_nn.1} parent=11 // pred_fallthru
        _
      // Predicated region
      $region25: #{lsm_continuation_nn.1} parent=11 // pred_check
        %p259 = pneg %p125
      $region26: #{lsm_continuation_nn.1} parent=11 // pred_check_branch
        %261 = sbr.rel (%p259) target = $region28
      $region27: #{lsm_continuation_nn.1} parent=11 // pred_region
        _
      $region28: #{lsm_continuation_nn.1} parent=11 // pred_fallthru
        _
      // Predicated region
      $region29: #{lsm_continuation_nn.1} parent=11 // pred_check
        %p262 = pneg %p146
      $region30: #{lsm_continuation_nn.1} parent=11 // pred_check_branch
        %264 = sbr.rel (%p262) target = $region32
      $region31: #{lsm_continuation_nn.1} parent=11 // pred_region
        _
      $region32: #{lsm_continuation_nn.1} parent=11 // pred_fallthru
        _
      // Predicated region
      $region33: #{lsm_continuation_nn.1} parent=11 // pred_check
        %p265 = pneg %p167
      $region34: #{lsm_continuation_nn.1} parent=11 // pred_check_branch
        %267 = sbr.rel (%p265) target = $region36
      $region35: #{lsm_continuation_nn.1} parent=11 // pred_region
        _
      $region36: #{lsm_continuation_nn.1} parent=11 // pred_fallthru
        _
      // Predicated region
      $region37: #{lsm_continuation_nn.1} parent=11 // pred_check
        %p268 = pneg %p188
      $region38: #{lsm_continuation_nn.1} parent=11 // pred_check_branch
        %270 = sbr.rel (%p268) target = $region40
      $region39: #{lsm_continuation_nn.1} parent=11 // pred_region
        _
      $region40: #{lsm_continuation_nn.1} parent=11 // pred_fallthru
        _
      // Predicated region
      $region41: #{lsm_continuation_nn.1} parent=11 // pred_check
        %p271 = pneg %p209
      $region42: #{lsm_continuation_nn.1} parent=11 // pred_check_branch
        %273 = sbr.rel (%p271) target = $region44
      $region43: #{lsm_continuation_nn.1} parent=11 // pred_region
        _
      $region44: #{lsm_continuation_nn.1} parent=11 // pred_fallthru
        _
    $region12: #{lsm_continuation_nn.1} parent=5 // pred_fallthru
      _
    %p274 = scmp.lt.s32.totalorder %s15, 2
    // Predicated region
    $region45: #{lsm_continuation_nn.1} parent=5 // pred_check
      %p275 = pneg %p274
    $region46: #{lsm_continuation_nn.1} parent=5 // pred_check_branch
      %277 = sbr.rel (%p275) target = $region48
    $region47: #{lsm_continuation_nn.1} parent=5 // pred_region
      // Predicated region
      $region49: #{lsm_continuation_nn.1} parent=47 // pred_check
        %p278 = pneg %p35
      $region50: #{lsm_continuation_nn.1} parent=47 // pred_check_branch
        %280 = sbr.rel (%p278) target = $region52
      $region51: #{lsm_continuation_nn.1} parent=47 // pred_region
        %s281 = smul.u32 4, %s15
        %p282 = scmp.lt.s32.totalorder %s281, 7
        %s283 = scalar_select %p282, %s281, 7
        %s284 = smul.addr %s283, 8
        %s285 = scalar_lea.vmem %s0, %s284
        %s286 = smul.u32 4, %s15
      $region52: #{lsm_continuation_nn.1} parent=47 // pred_fallthru
        _
    $region48: #{lsm_continuation_nn.1} parent=5 // pred_fallthru
      _
    %p287 = scmp.le.s32.totalorder 1, %s15
    %p288 = scmp.lt.s32.totalorder %s15, 3
    %p289 = pnand %p287, %p288
    %p290 = pneg %p289
    // Predicated region
    $region53: #{lsm_continuation_nn.1} parent=5 // pred_check
      _
    $region54: #{lsm_continuation_nn.1} parent=5 // pred_check_branch
      %292 = sbr.rel (%p289) target = $region56
    $region55: #{lsm_continuation_nn.1} parent=5 // pred_region
      %s293 = ssub.s32 %s15, 1
      %s294 = smul.u32 4, %s20
      %p295 = scmp.lt.s32.totalorder %s294, 7
      %s296 = scalar_select %p295, %s294, 7
      %s297 = smul.addr %s296, 8
      %s298 = scalar_lea.vmem %s0, %s297
      %p299 = pneg %p41
      %p300 = pneg %p38
      %p301 = pneg %p62
      %p302 = pneg %p59
      %p303 = pneg %p83
      %p304 = pneg %p80
      %p305 = pneg %p104
      %p306 = pneg %p101
      %p307 = pneg %p125
      %p308 = pneg %p122
      %p309 = pneg %p146
      %p310 = pneg %p143
      %p311 = pneg %p167
      %p312 = pneg %p164
      %p313 = pneg %p188
      %p314 = pneg %p185
      %p315 = pneg %p209
      %p316 = pneg %p206
      %p317 = pneg %p235
      %p318 = pneg %p232
      %s319 = smul.u32 4, %s20
      %p320 = scmp.lt.s32.totalorder %s319, 7
      %s321 = scalar_select %p320, %s319, 7
      %s322 = smul.addr %s321, 8
      %s323 = scalar_lea.vmem %s9, %s322
      %s324 = smul.u32 4, %s20
      %p325 = scmp.lt.s32.totalorder %s324, 7
      %s326 = scalar_select %p325, %s324, 7
      %s327 = smul.addr %s326, 8
      %s328 = scalar_lea.vmem %s0, %s327
      %s329 = smul.u32 4, %s20
      %s330 = smul.u32 4, %s20
      %p331 = scmp.lt.s32.totalorder %s330, 7
      %s332 = scalar_select %p331, %s330, 7
      %s333 = smul.addr %s332, 8
      %s334 = scalar_lea.vmem %s9, %s333
      %s335 = smul.u32 4, %s20
      %v336 = vld [vmem:[%s328] sm:$0xff]
      %v337 = vld [vmem:[%s328 + $0x8] sm:$0xff]
      %v338 = vld [vmem:[%s328 + $0x10] sm:$0xff]
      %v339 = vld [vmem:[%s328 + $0x18] sm:$0xff]
      %v340 = vld [vmem:[%s1] sm:$0xff]
      %v341 = vld [vmem:[%s1 + $0x8] sm:$0xff]
      %v342 = vld [vmem:[%s1 + $0x10] sm:$0xff]
      %v343 = vld [vmem:[%s1 + $0x18] sm:$0xff]
      %v344 = vld [vmem:[%s2] sm:$0x1]
      %v346 = vlaneseq
      %v347 = vshrl.u32 %v346, 7
      %v348 = vsub.s32 0, %v347
      %v349 = vrot.slane %v344, %v348
      %vm351 = vcmask 261120
      %v353 = vsel %vm351, %v336, 0
      %v356 = vsel %vm351, %v337, 0
      %v359 = vsel %vm351, %v338, 0
      %v362 = vsel %vm351, %v339, 0
      %364 = vmatprep.subr.mxu0 0.0
      %365 = vmatpush1.msra.mxu0 0.0
      %366 = vmatprep.subr.mxu0 0.0
      %367 = vmatpush1.msra.mxu0 0.0
      %368 = vmatprep.subr.mxu0 0.0
      %369 = vmatpush1.msra.mxu0 0.0
      %370 = vmatprep.subr.mxu0 0.0
      %371 = vmatpush1.msra.mxu0 0.0
      %372 = vmatprep.subr.mxu0 0.0
      %373 = vmatpush1.msra.mxu0 0.0
      %374 = vmatprep.subr.mxu0 0.0
      %375 = vmatpush1.msra.mxu0 0.0
      %376 = vmatprep.subr.mxu0 0.0
      %377 = vmatpush1.msra.mxu0 0.0
      %378 = vmatprep.subr.mxu0 0.0
      %379 = vmatpush1.msra.mxu0 0.0
      %380 = vmatprep.subr.mxu0 0.0
      %381 = vmatpush1.msra.mxu0 0.0
      %382 = vmatprep.subr.mxu0 0.0
      %383 = vmatpush1.msra.mxu0 0.0
      %384 = vmatprep.subr.mxu0 0.0
      %385 = vmatpush1.msra.mxu0 0.0
      %386 = vmatprep.subr.mxu0 0.0
      %387 = vmatpush1.msra.mxu0 0.0
      %388 = vmatprep.subr.mxu0 0.0
      %389 = vmatpush1.msra.mxu0 %v343
      %390 = vmatprep.subr.mxu0 0.0
      %391 = vmatpush1.msra.mxu0 %v342
      %392 = vmatprep.subr.mxu0 0.0
      %393 = vmatpush1.msra.mxu0 %v341
      %394 = vmatprep.subr.mxu0 0.0
      %395 = vmatpush1.msra.mxu0 %v340
      %396 = vmatprep.subr.mxu0 0.0
      %397 = vmatpush2.msra.mxu0 0.0
      %398 = vmatprep.subr.mxu0 0.0
      %399 = vmatpush2.msra.mxu0 0.0
      %400 = vmatprep.subr.mxu0 0.0
      %401 = vmatpush2.msra.mxu0 0.0
      %402 = vmatprep.subr.mxu0 0.0
      %403 = vmatpush2.msra.mxu0 0.0
      %404 = vmatprep.subr.mxu0 0.0
      %405 = vmatpush2.msra.mxu0 0.0
      %406 = vmatprep.subr.mxu0 0.0
      %407 = vmatpush2.msra.mxu0 0.0
      %408 = vmatprep.subr.mxu0 0.0
      %409 = vmatpush2.msra.mxu0 0.0
      %410 = vmatprep.subr.mxu0 0.0
      %411 = vmatpush2.msra.mxu0 0.0
      %412 = vmatprep.subr.mxu0 0.0
      %413 = vmatpush2.msra.mxu0 0.0
      %414 = vmatprep.subr.mxu0 0.0
      %415 = vmatpush2.msra.mxu0 0.0
      %416 = vmatprep.subr.mxu0 0.0
      %417 = vmatpush2.msra.mxu0 0.0
      %418 = vmatprep.subr.mxu0 0.0
      %419 = vmatpush2.msra.mxu0 0.0
      %420 = vmatprep.subr.mxu0 0.0
      %421 = vmatpush2.msra.mxu0 0.0
      %422 = vmatprep.subr.mxu0 0.0
      %423 = vmatpush2.msra.mxu0 0.0
      %424 = vmatprep.subr.mxu0 0.0
      %425 = vmatpush2.msra.mxu0 0.0
      %426 = vmatprep.subr.mxu0 0.0
      %427 = vmatpush2.msra.mxu0 0.0
      %428 = vmatprep.mubr.f32.mxu0 0.0
      %429 = vmatmul.mubr.f32.gmra.mxu0 %v353
      %v430 = vpop.f32.mrf.mxu0
      %v431 = vadd.f32 %v349, %v430
      %v432 = vpop.f32.mrf.mxu0
      %433 = vmatprep.mubr.f32.mxu0 0.0
      %434 = vmatmul.mubr.f32.gmra.mxu0 %v356
      %v435 = vpop.f32.mrf.mxu0
      %v436 = vadd.f32 %v349, %v435
      %v437 = vpop.f32.mrf.mxu0
      %438 = vmatprep.mubr.f32.mxu0 0.0
      %439 = vmatmul.mubr.f32.gmra.mxu0 %v359
      %v440 = vpop.f32.mrf.mxu0
      %v441 = vadd.f32 %v349, %v440
      %v442 = vpop.f32.mrf.mxu0
      %443 = vmatprep.mubr.f32.mxu0 0.0
      %444 = vmatmul.mubr.f32.gmra.mxu0 %v362
      %v445 = vpop.f32.mrf.mxu0
      %v446 = vadd.f32 %v349, %v445
      %v447 = vpop.f32.mrf.mxu0
      %448 = vdwg.mxu0
      %vm449 = vcmp.gt.f32.partialorder %v431, 0.0
      %vm450 = vcmp.gt.f32.partialorder %v436, 0.0
      %vm451 = vcmp.gt.f32.partialorder %v441, 0.0
      %vm452 = vcmp.gt.f32.partialorder %v446, 0.0
      %v453 = vmul.f32 %v431, 0.01
      %v454 = vmul.f32 %v436, 0.01
      %v455 = vmul.f32 %v441, 0.01
      %v456 = vmul.f32 %v446, 0.01
      %v457 = vsel %vm449, %v431, %v453
      %v458 = vsel %vm450, %v436, %v454
      %v459 = vsel %vm451, %v441, %v455
      %v460 = vsel %vm452, %v446, %v456
      %v461 = vld [vmem:[%s3] sm:$0xff]
      %v462 = vld [vmem:[%s3 + $0x8] sm:$0xff]
      %v463 = vld [vmem:[%s3 + $0x10] sm:$0xff]
      %v464 = vld [vmem:[%s3 + $0x18] sm:$0xff]
      %v465 = vld [vmem:[%s3 + $0x20] sm:$0xff]
      %v466 = vld [vmem:[%s3 + $0x28] sm:$0xff]
      %v467 = vld [vmem:[%s3 + $0x30] sm:$0xff]
      %v468 = vld [vmem:[%s3 + $0x38] sm:$0xff]
      %v469 = vld [vmem:[%s3 + $0x40] sm:$0xff]
      %v470 = vld [vmem:[%s3 + $0x48] sm:$0xff]
      %v471 = vld [vmem:[%s3 + $0x50] sm:$0xff]
      %v472 = vld [vmem:[%s3 + $0x58] sm:$0xff]
      %v473 = vld [vmem:[%s3 + $0x60] sm:$0xff]
      %v474 = vld [vmem:[%s3 + $0x68] sm:$0xff]
      %v475 = vld [vmem:[%s3 + $0x70] sm:$0xff]
      %v476 = vld [vmem:[%s3 + $0x78] sm:$0xff]
      %v477 = vld [vmem:[%s4] sm:$0x1]
      %v479 = vlaneseq
      %v480 = vshrl.u32 %v479, 7
      %v481 = vsub.s32 0, %v480
      %v482 = vrot.slane %v477, %v481
      %484 = vmatprep.subr.mxu0 0.0
      %485 = vmatpush1.msra.mxu0 %v476
      %486 = vmatprep.subr.mxu0 0.0
      %487 = vmatpush1.msra.mxu0 %v475
      %488 = vmatprep.subr.mxu0 0.0
      %489 = vmatpush1.msra.mxu0 %v474
      %490 = vmatprep.subr.mxu0 0.0
      %491 = vmatpush1.msra.mxu0 %v473
      %492 = vmatprep.subr.mxu0 0.0
      %493 = vmatpush1.msra.mxu0 %v472
      %494 = vmatprep.subr.mxu0 0.0
      %495 = vmatpush1.msra.mxu0 %v471
      %496 = vmatprep.subr.mxu0 0.0
      %497 = vmatpush1.msra.mxu0 %v470
      %498 = vmatprep.subr.mxu0 0.0
      %499 = vmatpush1.msra.mxu0 %v469
      %500 = vmatprep.subr.mxu0 0.0
      %501 = vmatpush1.msra.mxu0 %v468
      %502 = vmatprep.subr.mxu0 0.0
      %503 = vmatpush1.msra.mxu0 %v467
      %504 = vmatprep.subr.mxu0 0.0
      %505 = vmatpush1.msra.mxu0 %v466
      %506 = vmatprep.subr.mxu0 0.0
      %507 = vmatpush1.msra.mxu0 %v465
      %508 = vmatprep.subr.mxu0 0.0
      %509 = vmatpush1.msra.mxu0 %v464
      %510 = vmatprep.subr.mxu0 0.0
      %511 = vmatpush1.msra.mxu0 %v463
      %512 = vmatprep.subr.mxu0 0.0
      %513 = vmatpush1.msra.mxu0 %v462
      %514 = vmatprep.subr.mxu0 0.0
      %515 = vmatpush1.msra.mxu0 %v461
      %516 = vmatprep.subr.mxu0 0.0
      %517 = vmatpush2.msra.mxu0 0.0
      %518 = vmatprep.subr.mxu0 0.0
      %519 = vmatpush2.msra.mxu0 0.0
      %520 = vmatprep.subr.mxu0 0.0
      %521 = vmatpush2.msra.mxu0 0.0
      %522 = vmatprep.subr.mxu0 0.0
      %523 = vmatpush2.msra.mxu0 0.0
      %524 = vmatprep.subr.mxu0 0.0
      %525 = vmatpush2.msra.mxu0 0.0
      %526 = vmatprep.subr.mxu0 0.0
      %527 = vmatpush2.msra.mxu0 0.0
      %528 = vmatprep.subr.mxu0 0.0
      %529 = vmatpush2.msra.mxu0 0.0
      %530 = vmatprep.subr.mxu0 0.0
      %531 = vmatpush2.msra.mxu0 0.0
      %532 = vmatprep.subr.mxu0 0.0
      %533 = vmatpush2.msra.mxu0 0.0
      %534 = vmatprep.subr.mxu0 0.0
      %535 = vmatpush2.msra.mxu0 0.0
      %536 = vmatprep.subr.mxu0 0.0
      %537 = vmatpush2.msra.mxu0 0.0
      %538 = vmatprep.subr.mxu0 0.0
      %539 = vmatpush2.msra.mxu0 0.0
      %540 = vmatprep.subr.mxu0 0.0
      %541 = vmatpush2.msra.mxu0 0.0
      %542 = vmatprep.subr.mxu0 0.0
      %543 = vmatpush2.msra.mxu0 0.0
      %544 = vmatprep.subr.mxu0 0.0
      %545 = vmatpush2.msra.mxu0 0.0
      %546 = vmatprep.subr.mxu0 0.0
      %547 = vmatpush2.msra.mxu0 0.0
      %548 = vmatprep.mubr.f32.mxu0 0.0
      %549 = vmatmul.mubr.f32.gmra.mxu0 %v457
      %v550 = vpop.f32.mrf.mxu0
      %v551 = vadd.f32 %v482, %v550
      %v552 = vpop.f32.mrf.mxu0
      %553 = vmatprep.mubr.f32.mxu0 0.0
      %554 = vmatmul.mubr.f32.gmra.mxu0 %v458
      %v555 = vpop.f32.mrf.mxu0
      %v556 = vadd.f32 %v482, %v555
      %v557 = vpop.f32.mrf.mxu0
      %558 = vmatprep.mubr.f32.mxu0 0.0
      %559 = vmatmul.mubr.f32.gmra.mxu0 %v459
      %v560 = vpop.f32.mrf.mxu0
      %v561 = vadd.f32 %v482, %v560
      %v562 = vpop.f32.mrf.mxu0
      %563 = vmatprep.mubr.f32.mxu0 0.0
      %564 = vmatmul.mubr.f32.gmra.mxu0 %v460
      %v565 = vpop.f32.mrf.mxu0
      %v566 = vadd.f32 %v482, %v565
      %v567 = vpop.f32.mrf.mxu0
      %568 = vdwg.mxu0
      %vm569 = vcmp.gt.f32.partialorder %v551, 0.0
      %vm570 = vcmp.gt.f32.partialorder %v556, 0.0
      %vm571 = vcmp.gt.f32.partialorder %v561, 0.0
      %vm572 = vcmp.gt.f32.partialorder %v566, 0.0
      %v573 = vmul.f32 %v551, 0.01
      %v574 = vmul.f32 %v556, 0.01
      %v575 = vmul.f32 %v561, 0.01
      %v576 = vmul.f32 %v566, 0.01
      %v577 = vsel %vm569, %v551, %v573
      %v578 = vsel %vm570, %v556, %v574
      %v579 = vsel %vm571, %v561, %v575
      %v580 = vsel %vm572, %v566, %v576
      %v581 = vld [vmem:[%s5] sm:$0xff]
      %v582 = vld [vmem:[%s5 + $0x8] sm:$0xff]
      %v583 = vld [vmem:[%s5 + $0x10] sm:$0xff]
      %v584 = vld [vmem:[%s5 + $0x18] sm:$0xff]
      %v585 = vld [vmem:[%s5 + $0x20] sm:$0xff]
      %v586 = vld [vmem:[%s5 + $0x28] sm:$0xff]
      %v587 = vld [vmem:[%s5 + $0x30] sm:$0xff]
      %v588 = vld [vmem:[%s5 + $0x38] sm:$0xff]
      %v589 = vld [vmem:[%s5 + $0x40] sm:$0xff]
      %v590 = vld [vmem:[%s5 + $0x48] sm:$0xff]
      %v591 = vld [vmem:[%s5 + $0x50] sm:$0xff]
      %v592 = vld [vmem:[%s5 + $0x58] sm:$0xff]
      %v593 = vld [vmem:[%s5 + $0x60] sm:$0xff]
      %v594 = vld [vmem:[%s5 + $0x68] sm:$0xff]
      %v595 = vld [vmem:[%s5 + $0x70] sm:$0xff]
      %v596 = vld [vmem:[%s5 + $0x78] sm:$0xff]
      %v597 = vld [vmem:[%s6] sm:$0x1]
      %v599 = vlaneseq
      %v600 = vshrl.u32 %v599, 7
      %v601 = vsub.s32 0, %v600
      %v602 = vrot.slane %v597, %v601
      %604 = vmatprep.subr.mxu0 0.0
      %605 = vmatpush1.msra.mxu0 %v596
      %606 = vmatprep.subr.mxu0 0.0
      %607 = vmatpush1.msra.mxu0 %v595
      %608 = vmatprep.subr.mxu0 0.0
      %609 = vmatpush1.msra.mxu0 %v594
      %610 = vmatprep.subr.mxu0 0.0
      %611 = vmatpush1.msra.mxu0 %v593
      %612 = vmatprep.subr.mxu0 0.0
      %613 = vmatpush1.msra.mxu0 %v592
      %614 = vmatprep.subr.mxu0 0.0
      %615 = vmatpush1.msra.mxu0 %v591
      %616 = vmatprep.subr.mxu0 0.0
      %617 = vmatpush1.msra.mxu0 %v590
      %618 = vmatprep.subr.mxu0 0.0
      %619 = vmatpush1.msra.mxu0 %v589
      %620 = vmatprep.subr.mxu0 0.0
      %621 = vmatpush1.msra.mxu0 %v588
      %622 = vmatprep.subr.mxu0 0.0
      %623 = vmatpush1.msra.mxu0 %v587
      %624 = vmatprep.subr.mxu0 0.0
      %625 = vmatpush1.msra.mxu0 %v586
      %626 = vmatprep.subr.mxu0 0.0
      %627 = vmatpush1.msra.mxu0 %v585
      %628 = vmatprep.subr.mxu0 0.0
      %629 = vmatpush1.msra.mxu0 %v584
      %630 = vmatprep.subr.mxu0 0.0
      %631 = vmatpush1.msra.mxu0 %v583
      %632 = vmatprep.subr.mxu0 0.0
      %633 = vmatpush1.msra.mxu0 %v582
      %634 = vmatprep.subr.mxu0 0.0
      %635 = vmatpush1.msra.mxu0 %v581
      %636 = vmatprep.subr.mxu0 0.0
      %637 = vmatpush2.msra.mxu0 0.0
      %638 = vmatprep.subr.mxu0 0.0
      %639 = vmatpush2.msra.mxu0 0.0
      %640 = vmatprep.subr.mxu0 0.0
      %641 = vmatpush2.msra.mxu0 0.0
      %642 = vmatprep.subr.mxu0 0.0
      %643 = vmatpush2.msra.mxu0 0.0
      %644 = vmatprep.subr.mxu0 0.0
      %645 = vmatpush2.msra.mxu0 0.0
      %646 = vmatprep.subr.mxu0 0.0
      %647 = vmatpush2.msra.mxu0 0.0
      %648 = vmatprep.subr.mxu0 0.0
      %649 = vmatpush2.msra.mxu0 0.0
      %650 = vmatprep.subr.mxu0 0.0
      %651 = vmatpush2.msra.mxu0 0.0
      %652 = vmatprep.subr.mxu0 0.0
      %653 = vmatpush2.msra.mxu0 0.0
      %654 = vmatprep.subr.mxu0 0.0
      %655 = vmatpush2.msra.mxu0 0.0
      %656 = vmatprep.subr.mxu0 0.0
      %657 = vmatpush2.msra.mxu0 0.0
      %658 = vmatprep.subr.mxu0 0.0
      %659 = vmatpush2.msra.mxu0 0.0
      %660 = vmatprep.subr.mxu0 0.0
      %661 = vmatpush2.msra.mxu0 0.0
      %662 = vmatprep.subr.mxu0 0.0
      %663 = vmatpush2.msra.mxu0 0.0
      %664 = vmatprep.subr.mxu0 0.0
      %665 = vmatpush2.msra.mxu0 0.0
      %666 = vmatprep.subr.mxu0 0.0
      %667 = vmatpush2.msra.mxu0 0.0
      %668 = vmatprep.mubr.f32.mxu0 0.0
      %669 = vmatmul.mubr.f32.gmra.mxu0 %v577
      %v670 = vpop.f32.mrf.mxu0
      %v671 = vadd.f32 %v602, %v670
      %v672 = vpop.f32.mrf.mxu0
      %673 = vmatprep.mubr.f32.mxu0 0.0
      %674 = vmatmul.mubr.f32.gmra.mxu0 %v578
      %v675 = vpop.f32.mrf.mxu0
      %v676 = vadd.f32 %v602, %v675
      %v677 = vpop.f32.mrf.mxu0
      %678 = vmatprep.mubr.f32.mxu0 0.0
      %679 = vmatmul.mubr.f32.gmra.mxu0 %v579
      %v680 = vpop.f32.mrf.mxu0
      %v681 = vadd.f32 %v602, %v680
      %v682 = vpop.f32.mrf.mxu0
      %683 = vmatprep.mubr.f32.mxu0 0.0
      %684 = vmatmul.mubr.f32.gmra.mxu0 %v580
      %v685 = vpop.f32.mrf.mxu0
      %v686 = vadd.f32 %v602, %v685
      %v687 = vpop.f32.mrf.mxu0
      %688 = vdwg.mxu0
      %vm689 = vcmp.gt.f32.partialorder %v671, 0.0
      %vm690 = vcmp.gt.f32.partialorder %v676, 0.0
      %vm691 = vcmp.gt.f32.partialorder %v681, 0.0
      %vm692 = vcmp.gt.f32.partialorder %v686, 0.0
      %v693 = vmul.f32 %v671, 0.01
      %v694 = vmul.f32 %v676, 0.01
      %v695 = vmul.f32 %v681, 0.01
      %v696 = vmul.f32 %v686, 0.01
      %v697 = vsel %vm689, %v671, %v693
      %v698 = vsel %vm690, %v676, %v694
      %v699 = vsel %vm691, %v681, %v695
      %v700 = vsel %vm692, %v686, %v696
      %v701 = vld [vmem:[%s7] sm:$0xff]
      %v702 = vld [vmem:[%s7 + $0x8] sm:$0xff]
      %v703 = vld [vmem:[%s7 + $0x10] sm:$0xff]
      %v704 = vld [vmem:[%s7 + $0x18] sm:$0xff]
      %v705 = vld [vmem:[%s7 + $0x20] sm:$0xff]
      %v706 = vld [vmem:[%s7 + $0x28] sm:$0xff]
      %v707 = vld [vmem:[%s7 + $0x30] sm:$0xff]
      %v708 = vld [vmem:[%s7 + $0x38] sm:$0xff]
      %v709 = vld [vmem:[%s7 + $0x40] sm:$0xff]
      %v710 = vld [vmem:[%s7 + $0x48] sm:$0xff]
      %v711 = vld [vmem:[%s7 + $0x50] sm:$0xff]
      %v712 = vld [vmem:[%s7 + $0x58] sm:$0xff]
      %v713 = vld [vmem:[%s7 + $0x60] sm:$0xff]
      %v714 = vld [vmem:[%s7 + $0x68] sm:$0xff]
      %v715 = vld [vmem:[%s7 + $0x70] sm:$0xff]
      %v716 = vld [vmem:[%s7 + $0x78] sm:$0xff]
      %v717 = vld [vmem:[%s8] sm:$0x1]
      %v719 = vlaneseq
      %v720 = vshrl.u32 %v719, 7
      %v721 = vsub.s32 0, %v720
      %v722 = vrot.slane %v717, %v721
      %724 = vmatprep.subr.mxu0 0.0
      %725 = vmatpush1.msra.mxu0 %v716
      %726 = vmatprep.subr.mxu0 0.0
      %727 = vmatpush1.msra.mxu0 %v715
      %728 = vmatprep.subr.mxu0 0.0
      %729 = vmatpush1.msra.mxu0 %v714
      %730 = vmatprep.subr.mxu0 0.0
      %731 = vmatpush1.msra.mxu0 %v713
      %732 = vmatprep.subr.mxu0 0.0
      %733 = vmatpush1.msra.mxu0 %v712
      %734 = vmatprep.subr.mxu0 0.0
      %735 = vmatpush1.msra.mxu0 %v711
      %736 = vmatprep.subr.mxu0 0.0
      %737 = vmatpush1.msra.mxu0 %v710
      %738 = vmatprep.subr.mxu0 0.0
      %739 = vmatpush1.msra.mxu0 %v709
      %740 = vmatprep.subr.mxu0 0.0
      %741 = vmatpush1.msra.mxu0 %v708
      %742 = vmatprep.subr.mxu0 0.0
      %743 = vmatpush1.msra.mxu0 %v707
      %744 = vmatprep.subr.mxu0 0.0
      %745 = vmatpush1.msra.mxu0 %v706
      %746 = vmatprep.subr.mxu0 0.0
      %747 = vmatpush1.msra.mxu0 %v705
      %748 = vmatprep.subr.mxu0 0.0
      %749 = vmatpush1.msra.mxu0 %v704
      %750 = vmatprep.subr.mxu0 0.0
      %751 = vmatpush1.msra.mxu0 %v703
      %752 = vmatprep.subr.mxu0 0.0
      %753 = vmatpush1.msra.mxu0 %v702
      %754 = vmatprep.subr.mxu0 0.0
      %755 = vmatpush1.msra.mxu0 %v701
      %756 = vmatprep.subr.mxu0 0.0
      %757 = vmatpush2.msra.mxu0 0.0
      %758 = vmatprep.subr.mxu0 0.0
      %759 = vmatpush2.msra.mxu0 0.0
      %760 = vmatprep.subr.mxu0 0.0
      %761 = vmatpush2.msra.mxu0 0.0
      %762 = vmatprep.subr.mxu0 0.0
      %763 = vmatpush2.msra.mxu0 0.0
      %764 = vmatprep.subr.mxu0 0.0
      %765 = vmatpush2.msra.mxu0 0.0
      %766 = vmatprep.subr.mxu0 0.0
      %767 = vmatpush2.msra.mxu0 0.0
      %768 = vmatprep.subr.mxu0 0.0
      %769 = vmatpush2.msra.mxu0 0.0
      %770 = vmatprep.subr.mxu0 0.0
      %771 = vmatpush2.msra.mxu0 0.0
      %772 = vmatprep.subr.mxu0 0.0
      %773 = vmatpush2.msra.mxu0 0.0
      %774 = vmatprep.subr.mxu0 0.0
      %775 = vmatpush2.msra.mxu0 0.0
      %776 = vmatprep.subr.mxu0 0.0
      %777 = vmatpush2.msra.mxu0 0.0
      %778 = vmatprep.subr.mxu0 0.0
      %779 = vmatpush2.msra.mxu0 0.0
      %780 = vmatprep.subr.mxu0 0.0
      %781 = vmatpush2.msra.mxu0 0.0
      %782 = vmatprep.subr.mxu0 0.0
      %783 = vmatpush2.msra.mxu0 0.0
      %784 = vmatprep.subr.mxu0 0.0
      %785 = vmatpush2.msra.mxu0 0.0
      %786 = vmatprep.subr.mxu0 0.0
      %787 = vmatpush2.msra.mxu0 0.0
      %788 = vmatprep.mubr.f32.mxu0 0.0
      %789 = vmatmul.mubr.f32.gmra.mxu0 %v697
      %v790 = vpop.f32.mrf.mxu0
      %v791 = vadd.f32 %v722, %v790
      %v792 = vpop.f32.mrf.mxu0
      %793 = vmatprep.mubr.f32.mxu0 0.0
      %794 = vmatmul.mubr.f32.gmra.mxu0 %v698
      %v795 = vpop.f32.mrf.mxu0
      %v796 = vadd.f32 %v722, %v795
      %v797 = vpop.f32.mrf.mxu0
      %798 = vmatprep.mubr.f32.mxu0 0.0
      %799 = vmatmul.mubr.f32.gmra.mxu0 %v699
      %v800 = vpop.f32.mrf.mxu0
      %v801 = vadd.f32 %v722, %v800
      %v802 = vpop.f32.mrf.mxu0
      %803 = vmatprep.mubr.f32.mxu0 0.0
      %804 = vmatmul.mubr.f32.gmra.mxu0 %v700
      %v805 = vpop.f32.mrf.mxu0
      %v806 = vadd.f32 %v722, %v805
      %v807 = vpop.f32.mrf.mxu0
      %808 = vdwg.mxu0
      %vm809 = vcmask 31744
      %810 = vst.msk [vmem:[%s334] sm:$0xff] %vm809, %v791
      %811 = vst.msk [vmem:[%s334 + $0x8] sm:$0xff] %vm809, %v796
      %812 = vst.msk [vmem:[%s334 + $0x10] sm:$0xff] %vm809, %v801
      %813 = vst.msk [vmem:[%s334 + $0x18] sm:$0xff] %vm809, %v806
      %s814 = smul.u32 4, %s20
      %p815 = scmp.lt.s32.totalorder %s814, 7
      %s816 = scalar_select %p815, %s814, 7
      %s817 = smul.addr %s816, 8
      %s818 = scalar_lea.vmem %s9, %s817
      // Predicated region
      $region57: #{lsm_continuation_nn.1} parent=55 // pred_check
        %p819 = pneg %p232
      $region58: #{lsm_continuation_nn.1} parent=55 // pred_check_branch
        %821 = sbr.rel (%p819) target = $region60
      $region59: #{lsm_continuation_nn.1} parent=55 // pred_region
        %s822 = smul.u32 4, %s20
      $region60: #{lsm_continuation_nn.1} parent=55 // pred_fallthru
        _
    $region56: #{lsm_continuation_nn.1} parent=5 // pred_fallthru
      _
    %p823 = scmp.le.s32.totalorder 2, %s15
    // Predicated region
    $region61: #{lsm_continuation_nn.1} parent=5 // pred_check
      %p824 = pneg %p823
    $region62: #{lsm_continuation_nn.1} parent=5 // pred_check_branch
      %826 = sbr.rel (%p824) target = $region64
    $region63: #{lsm_continuation_nn.1} parent=5 // pred_region
      %s827 = ssub.s32 %s15, 2
      // Predicated region
      $region65: #{lsm_continuation_nn.1} parent=63 // pred_check
        %p828 = pneg %p238
      $region66: #{lsm_continuation_nn.1} parent=63 // pred_check_branch
        %830 = sbr.rel (%p828) target = $region68
      $region67: #{lsm_continuation_nn.1} parent=63 // pred_region
        %s831 = smul.u32 4, %s21
        %p832 = scmp.lt.s32.totalorder %s831, 7
        %s833 = scalar_select %p832, %s831, 7
        %s834 = smul.addr %s833, 8
        %s835 = scalar_lea.vmem %s9, %s834
      $region68: #{lsm_continuation_nn.1} parent=63 // pred_fallthru
        _
    $region64: #{lsm_continuation_nn.1} parent=5 // pred_fallthru
      _
  $region6: #{lsm_continuation_nn.1} parent=0 // loop_footer
    %s19 = sadd.s32 1, %s15
  $region7: #{lsm_continuation_nn.1} parent=0 // loop_footer_branch
    %14 = sbr.rel target = $region3
  $region8: #{lsm_continuation_nn.1} parent=0 // loop_exit
    _

</llo_original>
